<compile_context>
chip_gen: v6e
topology: v6e:2x2x1
jax: 0.10.0
libtpu: 0.0.40
codegen_flags: <defaults>
</compile_context>

<pallas_src>
import jax
import jax.numpy as jnp
from jax.experimental import pallas as pl
from jax.experimental.pallas import tpu as pltpu

HIDDEN_PAD = 128          # lane-dense hidden width (true hidden sizes 64 / 32)
_DEFAULT_TILE_B = 1024    # batch tile; multiple of 8 (f32 sublanes); sweep 512-4096


def _round_up(n, m):
    return ((n + m - 1) // m) * m


def _mlp_kernel(x_ref, w1_ref, b1_ref, w2_ref, b2_ref, w3_ref, b3_ref, o_ref):
    # Layer 1: Linear(in_size -> 64, padded to 128 lanes) + ReLU6.
    h1 = jnp.dot(x_ref[...], w1_ref[...], preferred_element_type=jnp.float32)
    h1 = jnp.clip(h1 + b1_ref[...], 0.0, 6.0)
    # Dropout(0.1): identity at inference.

    # Layer 2: Linear(64 -> 32, padded 128x128) + ReLU6.
    h2 = jnp.dot(h1, w2_ref[...], preferred_element_type=jnp.float32)
    h2 = jnp.clip(h2 + b2_ref[...], 0.0, 6.0)
    # Dropout(0.1): identity at inference.

    # Layer 3: Linear(32 padded to 128 -> out_size) + Sigmoid.
    logits = jnp.dot(h2, w3_ref[...], preferred_element_type=jnp.float32)
    logits = logits + b3_ref[...]
    # sigmoid = 1 / (1 + exp(-x)); exp + approx reciprocal both run on the EUP.
    o_ref[...] = pl.reciprocal(1.0 + jnp.exp(-logits), approx=True)


def nn_classifier_forward(x, params, *, tile_b=_DEFAULT_TILE_B):
    """Fused MLP forward. x: [B, in_size] float32. params already lane-padded."""
    w1, b1, w2, b2, w3, b3 = params
    B, in_size = x.shape
    out_size = w3.shape[1]

    # Batch tile: at most tile_b, at least B rounded up to the f32 sublane (8).
    tile_b = min(tile_b, _round_up(B, 8))
    b_pad = _round_up(B, tile_b)
    if b_pad != B:
        x = jnp.pad(x, ((0, b_pad - B), (0, 0)))

    grid = (b_pad // tile_b,)

    def resident(shape):
        # Full-array block, constant index -> stays in VMEM across the grid.
        return pl.BlockSpec(shape, lambda i: (0, 0))

    flops = 2 * b_pad * (in_size * HIDDEN_PAD
                         + HIDDEN_PAD * HIDDEN_PAD
                         + HIDDEN_PAD * out_size)
    bytes_accessed = 4 * (b_pad * (in_size + out_size)
                          + w1.size + b1.size + w2.size + b2.size
                          + w3.size + b3.size)

    out = pl.pallas_call(
        _mlp_kernel,
        out_shape=jax.ShapeDtypeStruct((b_pad, out_size), jnp.float32),
        grid=grid,
        in_specs=[
            pl.BlockSpec((tile_b, in_size), lambda i: (i, 0)),   # streamed activations
            resident(w1.shape), resident(b1.shape),
            resident(w2.shape), resident(b2.shape),
            resident(w3.shape), resident(b3.shape),
        ],
        out_specs=pl.BlockSpec((tile_b, out_size), lambda i: (i, 0)),
        compiler_params=pltpu.CompilerParams(
            dimension_semantics=("parallel",)),   # megacore split on v7x
        cost_estimate=pl.CostEstimate(
            flops=flops,
            transcendentals=b_pad * out_size,
            bytes_accessed=bytes_accessed),
    )(x, w1, b1, w2, b2, w3, b3)

    return out[:B]


def init_params(key, in_size, out_size):
    """PyTorch nn.Linear-style init (U(-1/sqrt(fan_in), +bound)); hidden dims
    zero-padded to 128 lanes once here (not per call)."""
    def linear(k, fan_in, fan_out, pad_in, pad_out):
        kw, kb = jax.random.split(k)
        bound = 1.0 / jnp.sqrt(jnp.float32(fan_in))
        w = jax.random.uniform(kw, (fan_in, fan_out), jnp.float32, -bound, bound)
        b = jax.random.uniform(kb, (1, fan_out), jnp.float32, -bound, bound)
        w = jnp.pad(w, ((0, pad_in - fan_in), (0, pad_out - fan_out)))
        b = jnp.pad(b, ((0, 0), (0, pad_out - fan_out)))
        return w, b

    k1, k2, k3 = jax.random.split(key, 3)
    w1, b1 = linear(k1, in_size, 64, in_size, HIDDEN_PAD)       # [in, 128], [1, 128]
    w2, b2 = linear(k2, 64, 32, HIDDEN_PAD, HIDDEN_PAD)         # [128, 128], [1, 128]
    w3, b3 = linear(k3, 32, out_size, HIDDEN_PAD, out_size)     # [128, out], [1, out]
    return (w1, b1, w2, b2, w3, b3)


def reference_forward(x, params):
    # Zero-padding makes the padded weights mathematically identical to unpadded.
    w1, b1, w2, b2, w3, b3 = params
    h1 = jnp.clip(x @ w1 + b1, 0.0, 6.0)
    h2 = jnp.clip(h1 @ w2 + b2, 0.0, 6.0)
    return jax.nn.sigmoid(h2 @ w3 + b3)


if __name__ == "__main__":
    key = jax.random.PRNGKey(0)
    k_x, k_p = jax.random.split(key)

    batch, in_size, out_size = 8, 16, 8
    x = jax.random.normal(k_x, (batch, in_size), dtype=jnp.float32)
    params = init_params(k_p, in_size, out_size)

    out = nn_classifier_forward(x, params)
    out = jax.block_until_ready(out)

    ref = reference_forward(x, params)
    assert out.shape == (batch, out_size)
    # approx-reciprocal sigmoid: allow ~2e-3 abs/rel vs exact reference
    assert jnp.allclose(out, ref, atol=2e-3, rtol=2e-3), "mismatch vs reference"

    print("KERNEL_OK")
</pallas_src>

<mosaic_0001>
module attributes {stable_mosaic.version = 11 : i64} {
  func.func @_mlp_kernel(%arg0: i32, %arg1: memref<8x16xf32, #tpu.memory_space<vmem>>, %arg2: memref<16x128xf32, #tpu.memory_space<vmem>>, %arg3: memref<1x128xf32, #tpu.memory_space<vmem>>, %arg4: memref<128x128xf32, #tpu.memory_space<vmem>>, %arg5: memref<1x128xf32, #tpu.memory_space<vmem>>, %arg6: memref<128x8xf32, #tpu.memory_space<vmem>>, %arg7: memref<1x8xf32, #tpu.memory_space<vmem>>, %arg8: memref<8x8xf32, #tpu.memory_space<vmem>>) attributes {dimension_semantics = [#tpu.dimension_semantics<parallel>], iteration_bounds = array<i64: 1>, scalar_prefetch = 0 : i64, scratch_operands = 0 : i64, tpu.core_type = #tpu.core_type<tc>, window_params = [{transform_indices = @transform_0, window_bounds = array<i64: 8, 16>}, {pipeline_mode = #tpu.pipeline_mode<synchronous>, transform_indices = @transform_1, window_bounds = array<i64: 16, 128>}, {pipeline_mode = #tpu.pipeline_mode<synchronous>, transform_indices = @transform_2, window_bounds = array<i64: 1, 128>}, {pipeline_mode = #tpu.pipeline_mode<synchronous>, transform_indices = @transform_3, window_bounds = array<i64: 128, 128>}, {pipeline_mode = #tpu.pipeline_mode<synchronous>, transform_indices = @transform_4, window_bounds = array<i64: 1, 128>}, {pipeline_mode = #tpu.pipeline_mode<synchronous>, transform_indices = @transform_5, window_bounds = array<i64: 128, 8>}, {pipeline_mode = #tpu.pipeline_mode<synchronous>, transform_indices = @transform_6, window_bounds = array<i64: 1, 8>}, {transform_indices = @transform_7, window_bounds = array<i64: 8, 8>}]} {
    %c0 = arith.constant 0 : index
    %c0_0 = arith.constant 0 : index
    %0 = vector.load %arg1[%c0, %c0_0] : memref<8x16xf32, #tpu.memory_space<vmem>>, vector<8x16xf32>
    %c0_1 = arith.constant 0 : index
    %c0_2 = arith.constant 0 : index
    %1 = vector.load %arg2[%c0_1, %c0_2] : memref<16x128xf32, #tpu.memory_space<vmem>>, vector<16x128xf32>
    %cst = arith.constant dense<0.000000e+00> : vector<8x128xf32>
    %2 = tpu.matmul %0, %1, %cst {dimension_numbers = #tpu.dot_dimension_numbers<[1], [0], [0], [1], [0, 0, 1, 1], [], []>} : vector<8x16xf32>, vector<16x128xf32>, vector<8x128xf32> -> vector<8x128xf32>
    %c0_3 = arith.constant 0 : index
    %c0_4 = arith.constant 0 : index
    %3 = vector.load %arg3[%c0_3, %c0_4] : memref<1x128xf32, #tpu.memory_space<vmem>>, vector<1x128xf32>
    %4 = vector.broadcast %3 : vector<1x128xf32> to vector<8x128xf32>
    %5 = arith.addf %2, %4 : vector<8x128xf32>
    %cst_5 = arith.constant 0.000000e+00 : f32
    %cst_6 = arith.constant 6.000000e+00 : f32
    %6 = vector.broadcast %cst_5 : f32 to vector<8x128xf32>
    %7 = arith.maximumf %6, %5 : vector<8x128xf32>
    %8 = vector.broadcast %cst_6 : f32 to vector<8x128xf32>
    %9 = arith.minimumf %8, %7 : vector<8x128xf32>
    %c0_7 = arith.constant 0 : index
    %c0_8 = arith.constant 0 : index
    %10 = vector.load %arg4[%c0_7, %c0_8] : memref<128x128xf32, #tpu.memory_space<vmem>>, vector<128x128xf32>
    %cst_9 = arith.constant dense<0.000000e+00> : vector<8x128xf32>
    %11 = tpu.matmul %9, %10, %cst_9 {dimension_numbers = #tpu.dot_dimension_numbers<[1], [0], [0], [1], [0, 0, 1, 1], [], []>} : vector<8x128xf32>, vector<128x128xf32>, vector<8x128xf32> -> vector<8x128xf32>
    %c0_10 = arith.constant 0 : index
    %c0_11 = arith.constant 0 : index
    %12 = vector.load %arg5[%c0_10, %c0_11] : memref<1x128xf32, #tpu.memory_space<vmem>>, vector<1x128xf32>
    %13 = vector.broadcast %12 : vector<1x128xf32> to vector<8x128xf32>
    %14 = arith.addf %11, %13 : vector<8x128xf32>
    %cst_12 = arith.constant 0.000000e+00 : f32
    %cst_13 = arith.constant 6.000000e+00 : f32
    %15 = vector.broadcast %cst_12 : f32 to vector<8x128xf32>
    %16 = arith.maximumf %15, %14 : vector<8x128xf32>
    %17 = vector.broadcast %cst_13 : f32 to vector<8x128xf32>
    %18 = arith.minimumf %17, %16 : vector<8x128xf32>
    %c0_14 = arith.constant 0 : index
    %c0_15 = arith.constant 0 : index
    %19 = vector.load %arg6[%c0_14, %c0_15] : memref<128x8xf32, #tpu.memory_space<vmem>>, vector<128x8xf32>
    %cst_16 = arith.constant dense<0.000000e+00> : vector<8x8xf32>
    %20 = tpu.matmul %18, %19, %cst_16 {dimension_numbers = #tpu.dot_dimension_numbers<[1], [0], [0], [1], [0, 0, 1, 1], [], []>} : vector<8x128xf32>, vector<128x8xf32>, vector<8x8xf32> -> vector<8x8xf32>
    %c0_17 = arith.constant 0 : index
    %c0_18 = arith.constant 0 : index
    %21 = vector.load %arg7[%c0_17, %c0_18] : memref<1x8xf32, #tpu.memory_space<vmem>>, vector<1x8xf32>
    %22 = vector.broadcast %21 : vector<1x8xf32> to vector<8x8xf32>
    %23 = arith.addf %20, %22 : vector<8x8xf32>
    %cst_19 = arith.constant 0.000000e+00 : f32
    %24 = vector.broadcast %cst_19 : f32 to vector<8x8xf32>
    %25 = arith.subf %24, %23 : vector<8x8xf32>
    %26 = math.exp %25 : vector<8x8xf32>
    %cst_20 = arith.constant 1.000000e+00 : f32
    %27 = vector.broadcast %cst_20 : f32 to vector<8x8xf32>
    %28 = arith.addf %27, %26 : vector<8x8xf32>
    %29 = tpu.reciprocal %28 {approx = true} : vector<8x8xf32> -> vector<8x8xf32>
    %c0_21 = arith.constant 0 : index
    %c0_22 = arith.constant 0 : index
    %30 = vector.load %arg8[%c0_21, %c0_22] : memref<8x8xf32, #tpu.memory_space<vmem>>, vector<8x8xf32>
    tpu.vector_store %arg8[%c0_21, %c0_22], %29 {strides = array<i32>} : memref<8x8xf32, #tpu.memory_space<vmem>>, vector<8x8xf32>,
    return
  }
  func.func @transform_0(%arg0: i32) -> (i32, i32) {
    %c0_i32 = arith.constant 0 : i32
    %c0_i32_0 = arith.constant 0 : i32
    return %arg0, %c0_i32 : i32, i32
  }
  func.func @transform_1(%arg0: i32) -> (i32, i32) {
    %c0_i32 = arith.constant 0 : i32
    %c0_i32_0 = arith.constant 0 : i32
    %c0_i32_1 = arith.constant 0 : i32
    return %c0_i32, %c0_i32_0 : i32, i32
  }
  func.func @transform_2(%arg0: i32) -> (i32, i32) {
    %c0_i32 = arith.constant 0 : i32
    %c0_i32_0 = arith.constant 0 : i32
    %c0_i32_1 = arith.constant 0 : i32
    return %c0_i32, %c0_i32_0 : i32, i32
  }
  func.func @transform_3(%arg0: i32) -> (i32, i32) {
    %c0_i32 = arith.constant 0 : i32
    %c0_i32_0 = arith.constant 0 : i32
    %c0_i32_1 = arith.constant 0 : i32
    return %c0_i32, %c0_i32_0 : i32, i32
  }
  func.func @transform_4(%arg0: i32) -> (i32, i32) {
    %c0_i32 = arith.constant 0 : i32
    %c0_i32_0 = arith.constant 0 : i32
    %c0_i32_1 = arith.constant 0 : i32
    return %c0_i32, %c0_i32_0 : i32, i32
  }
  func.func @transform_5(%arg0: i32) -> (i32, i32) {
    %c0_i32 = arith.constant 0 : i32
    %c0_i32_0 = arith.constant 0 : i32
    %c0_i32_1 = arith.constant 0 : i32
    return %c0_i32, %c0_i32_0 : i32, i32
  }
  func.func @transform_6(%arg0: i32) -> (i32, i32) {
    %c0_i32 = arith.constant 0 : i32
    %c0_i32_0 = arith.constant 0 : i32
    %c0_i32_1 = arith.constant 0 : i32
    return %c0_i32, %c0_i32_0 : i32, i32
  }
  func.func @transform_7(%arg0: i32) -> (i32, i32) {
    %c0_i32 = arith.constant 0 : i32
    %c0_i32_0 = arith.constant 0 : i32
    return %arg0, %c0_i32 : i32, i32
  }
}

</mosaic_0001>

<llo_original>
// kernel: tpu_custom_call.1
$region0: #{tpu_custom_call.1}
  #allocation0 [shape = 'u32[]', space=smem, size = 0x4, offset = 0x4, fixed_abs, tag = 'smem constant byte address 0x4 - core index']
  #allocation1 [shape = 'u32[144,128]{1,0:T(1,128)}', space=vmem, size = 0x12000, scoped, tag = 'internal scratch']
  %s0 = inlined_call_operand.vmem [shape: f32[8,16], index: 0, kind: input, shape index: {}]
  %s1 = inlined_call_operand.hbm [shape: f32[16,128], index: 1, kind: input, shape index: {}]
  %s2 = inlined_call_operand.vmem [shape: f32[1,128], index: 2, kind: input, shape index: {}]
  %s3 = inlined_call_operand.vmem [shape: f32[128,128], index: 3, kind: input, shape index: {}]
  %s4 = inlined_call_operand.hbm [shape: f32[1,128], index: 4, kind: input, shape index: {}]
  %s5 = inlined_call_operand.vmem [shape: f32[128,8], index: 5, kind: input, shape index: {}]
  %s6 = inlined_call_operand.vmem [shape: f32[1,8], index: 6, kind: input, shape index: {}]
  %s7 = inlined_call_operand.hbm [shape: f32[8,8], index: 7, kind: output, shape index: {}]
  %s8 = sld [smem:[#allocation0]]
  $region46: #{tpu_custom_call.1} parent=0
    _
  %s10 = ssub.s32 1, %s8
  %s11 = scalar_select 0, %s10, %s8
  $region1: #{tpu_custom_call.1} parent=0
    #allocation2 [shape = 'u8[8192]{0}', space=vmem, size = 0x2000, scoped, tag = 'input window, operand 1, single buffered']
    #allocation3 [shape = 's32[1]{0}', space=sflag, size = 0x4, scoped, tag = 'scoped memory for tpu_custom_call.1']
    #allocation4 [shape = 's32[1]{0}', space=sflag, size = 0x4, scoped, tag = 'scoped memory for tpu_custom_call.1']
    #allocation5 [shape = 'u8[512]{0}', space=vmem, size = 0x400, scoped, tag = 'input window, operand 4, single buffered']
    #allocation6 [shape = 's32[1]{0}', space=sflag, size = 0x4, scoped, tag = 'scoped memory for tpu_custom_call.1']
    #allocation7 [shape = 'u8[4096]{0}', space=vmem, size = 0x1000, scoped, tag = 'output window, operand 0, single buffered']
    %12 = vsyncpa [#allocation3], 0
    %13 = vsyncpa [#allocation6], 0
    %14 = vsyncpa [#allocation4], 0
    // Predicated region
    $region2: #{tpu_custom_call.1} parent=1 // pred_check
      _
    $region3: #{tpu_custom_call.1} parent=1 // pred_check_branch
      %16 = sbr.rel (0) target = $region5
    $region4: #{tpu_custom_call.1} parent=1 // pred_region
      _
    $region5: #{tpu_custom_call.1} parent=1 // pred_fallthru
      _
    // Predicated region
    $region6: #{tpu_custom_call.1} parent=1 // pred_check
      _
    $region7: #{tpu_custom_call.1} parent=1 // pred_check_branch
      %18 = sbr.rel (0) target = $region9
    $region8: #{tpu_custom_call.1} parent=1 // pred_region
      %s20 = ssub.s32 256, 256
      %21 = vsyncadd [#allocation3], %s20
      %s22 = sshll.u32 [#allocation2], 4
      %s23 = int_to_ptr.vmem [resolvable:$true] %s22
      %28 = dma.hbm_to_vmem [thread:$0]  %s1, 256, %s23, [#allocation3], 128, 128, 8
    $region9: #{tpu_custom_call.1} parent=1 // pred_fallthru
      _
    // Predicated region
    $region10: #{tpu_custom_call.1} parent=1 // pred_check
      _
    $region11: #{tpu_custom_call.1} parent=1 // pred_check_branch
      %30 = sbr.rel (0) target = $region13
    $region12: #{tpu_custom_call.1} parent=1 // pred_region
      _
    $region13: #{tpu_custom_call.1} parent=1 // pred_fallthru
      _
    // Predicated region
    $region14: #{tpu_custom_call.1} parent=1 // pred_check
      _
    $region15: #{tpu_custom_call.1} parent=1 // pred_check_branch
      %32 = sbr.rel (0) target = $region17
    $region16: #{tpu_custom_call.1} parent=1 // pred_region
      _
    $region17: #{tpu_custom_call.1} parent=1 // pred_fallthru
      _
    // Predicated region
    $region18: #{tpu_custom_call.1} parent=1 // pred_check
      _
    $region19: #{tpu_custom_call.1} parent=1 // pred_check_branch
      %34 = sbr.rel (0) target = $region21
    $region20: #{tpu_custom_call.1} parent=1 // pred_region
      %s36 = ssub.s32 16, 16
      %37 = vsyncadd [#allocation6], %s36
      %s39 = sshll.u32 [#allocation5], 4
      %s40 = int_to_ptr.vmem [resolvable:$true] %s39
      %42 = dma.hbm_to_vmem [thread:$0]  %s4, 16, %s40, [#allocation6]
    $region21: #{tpu_custom_call.1} parent=1 // pred_fallthru
      _
    // Predicated region
    $region22: #{tpu_custom_call.1} parent=1 // pred_check
      _
    $region23: #{tpu_custom_call.1} parent=1 // pred_check_branch
      %44 = sbr.rel (0) target = $region25
    $region24: #{tpu_custom_call.1} parent=1 // pred_region
      _
    $region25: #{tpu_custom_call.1} parent=1 // pred_fallthru
      _
    // Predicated region
    $region26: #{tpu_custom_call.1} parent=1 // pred_check
      _
    $region27: #{tpu_custom_call.1} parent=1 // pred_check_branch
      %46 = sbr.rel (0) target = $region29
    $region28: #{tpu_custom_call.1} parent=1 // pred_region
      _
    $region29: #{tpu_custom_call.1} parent=1 // pred_fallthru
      _
    // Predicated region
    $region30: #{tpu_custom_call.1} parent=1 // pred_check
      _
    $region31: #{tpu_custom_call.1} parent=1 // pred_check_branch
      %48 = sbr.rel (0) target = $region33
    $region32: #{tpu_custom_call.1} parent=1 // pred_region
      %49 = dma.done [#allocation3], 256
    $region33: #{tpu_custom_call.1} parent=1 // pred_fallthru
      _
    // Predicated region
    $region34: #{tpu_custom_call.1} parent=1 // pred_check
      _
    $region35: #{tpu_custom_call.1} parent=1 // pred_check_branch
      %51 = sbr.rel (0) target = $region37
    $region36: #{tpu_custom_call.1} parent=1 // pred_region
      %52 = dma.done [#allocation6], 16
    $region37: #{tpu_custom_call.1} parent=1 // pred_fallthru
      _
    %v53 = vld [vmem:[%s0] sm:$0xff]
    %v54 = vld [vmem:[#allocation2] sm:$0xff]
    %v55 = vld [vmem:[#allocation2 + $0x8] sm:$0xff]
    %v56 = vld [vmem:[%s2] sm:$0x1]
    %v58 = vlaneseq
    %v59 = vshrl.u32 %v58, 7
    %v60 = vsub.s32 0, %v59
    %v61 = vrot.slane %v56, %v60
    %vm63 = vcmask 130048
    %v65 = vsel %vm63, %v53, 0
    %67 = vmatprep.subr.mxu0 0.0
    %68 = vmatpush1.msra.mxu0 0.0
    %69 = vmatprep.subr.mxu0 0.0
    %70 = vmatpush1.msra.mxu0 0.0
    %71 = vmatprep.subr.mxu0 0.0
    %72 = vmatpush1.msra.mxu0 0.0
    %73 = vmatprep.subr.mxu0 0.0
    %74 = vmatpush1.msra.mxu0 0.0
    %75 = vmatprep.subr.mxu0 0.0
    %76 = vmatpush1.msra.mxu0 0.0
    %77 = vmatprep.subr.mxu0 0.0
    %78 = vmatpush1.msra.mxu0 0.0
    %79 = vmatprep.subr.mxu0 0.0
    %80 = vmatpush1.msra.mxu0 0.0
    %81 = vmatprep.subr.mxu0 0.0
    %82 = vmatpush1.msra.mxu0 0.0
    %83 = vmatprep.subr.mxu0 0.0
    %84 = vmatpush1.msra.mxu0 0.0
    %85 = vmatprep.subr.mxu0 0.0
    %86 = vmatpush1.msra.mxu0 0.0
    %87 = vmatprep.subr.mxu0 0.0
    %88 = vmatpush1.msra.mxu0 0.0
    %89 = vmatprep.subr.mxu0 0.0
    %90 = vmatpush1.msra.mxu0 0.0
    %91 = vmatprep.subr.mxu0 0.0
    %92 = vmatpush1.msra.mxu0 0.0
    %93 = vmatprep.subr.mxu0 0.0
    %94 = vmatpush1.msra.mxu0 0.0
    %95 = vmatprep.subr.mxu0 0.0
    %96 = vmatpush1.msra.mxu0 %v55
    %97 = vmatprep.subr.mxu0 0.0
    %98 = vmatpush1.msra.mxu0 %v54
    %99 = vmatprep.subr.mxu0 0.0
    %100 = vmatpush2.msra.mxu0 0.0
    %101 = vmatprep.subr.mxu0 0.0
    %102 = vmatpush2.msra.mxu0 0.0
    %103 = vmatprep.subr.mxu0 0.0
    %104 = vmatpush2.msra.mxu0 0.0
    %105 = vmatprep.subr.mxu0 0.0
    %106 = vmatpush2.msra.mxu0 0.0
    %107 = vmatprep.subr.mxu0 0.0
    %108 = vmatpush2.msra.mxu0 0.0
    %109 = vmatprep.subr.mxu0 0.0
    %110 = vmatpush2.msra.mxu0 0.0
    %111 = vmatprep.subr.mxu0 0.0
    %112 = vmatpush2.msra.mxu0 0.0
    %113 = vmatprep.subr.mxu0 0.0
    %114 = vmatpush2.msra.mxu0 0.0
    %115 = vmatprep.subr.mxu0 0.0
    %116 = vmatpush2.msra.mxu0 0.0
    %117 = vmatprep.subr.mxu0 0.0
    %118 = vmatpush2.msra.mxu0 0.0
    %119 = vmatprep.subr.mxu0 0.0
    %120 = vmatpush2.msra.mxu0 0.0
    %121 = vmatprep.subr.mxu0 0.0
    %122 = vmatpush2.msra.mxu0 0.0
    %123 = vmatprep.subr.mxu0 0.0
    %124 = vmatpush2.msra.mxu0 0.0
    %125 = vmatprep.subr.mxu0 0.0
    %126 = vmatpush2.msra.mxu0 0.0
    %127 = vmatprep.subr.mxu0 0.0
    %128 = vmatpush2.msra.mxu0 0.0
    %129 = vmatprep.subr.mxu0 0.0
    %130 = vmatpush2.msra.mxu0 0.0
    %131 = vmatprep.mubr.f32.mxu0 0.0
    %132 = vmatmul.mubr.f32.gmra.mxu0 %v65
    %v133 = vpop.f32.mrf.mxu0
    %v134 = vadd.f32 %v61, %v133
    %v135 = vpop.f32.mrf.mxu0
    %136 = vdwg.mxu0
    %v137 = vmax.f32 %v134, 0.0
    %v138 = vmin.f32 %v137, 6.0
    %v139 = vld [vmem:[%s3] sm:$0xff]
    %v140 = vld [vmem:[%s3 + $0x8] sm:$0xff]
    %v141 = vld [vmem:[%s3 + $0x10] sm:$0xff]
    %v142 = vld [vmem:[%s3 + $0x18] sm:$0xff]
    %v143 = vld [vmem:[%s3 + $0x20] sm:$0xff]
    %v144 = vld [vmem:[%s3 + $0x28] sm:$0xff]
    %v145 = vld [vmem:[%s3 + $0x30] sm:$0xff]
    %v146 = vld [vmem:[%s3 + $0x38] sm:$0xff]
    %v147 = vld [vmem:[%s3 + $0x40] sm:$0xff]
    %v148 = vld [vmem:[%s3 + $0x48] sm:$0xff]
    %v149 = vld [vmem:[%s3 + $0x50] sm:$0xff]
    %v150 = vld [vmem:[%s3 + $0x58] sm:$0xff]
    %v151 = vld [vmem:[%s3 + $0x60] sm:$0xff]
    %v152 = vld [vmem:[%s3 + $0x68] sm:$0xff]
    %v153 = vld [vmem:[%s3 + $0x70] sm:$0xff]
    %v154 = vld [vmem:[%s3 + $0x78] sm:$0xff]
    %v155 = vld [vmem:[#allocation5] sm:$0x1]
    %v157 = vlaneseq
    %v158 = vshrl.u32 %v157, 7
    %v159 = vsub.s32 0, %v158
    %v160 = vrot.slane %v155, %v159
    %162 = vmatprep.subr.mxu0 0.0
    %163 = vmatpush1.msra.mxu0 %v154
    %164 = vmatprep.subr.mxu0 0.0
    %165 = vmatpush1.msra.mxu0 %v153
    %166 = vmatprep.subr.mxu0 0.0
    %167 = vmatpush1.msra.mxu0 %v152
    %168 = vmatprep.subr.mxu0 0.0
    %169 = vmatpush1.msra.mxu0 %v151
    %170 = vmatprep.subr.mxu0 0.0
    %171 = vmatpush1.msra.mxu0 %v150
    %172 = vmatprep.subr.mxu0 0.0
    %173 = vmatpush1.msra.mxu0 %v149
    %174 = vmatprep.subr.mxu0 0.0
    %175 = vmatpush1.msra.mxu0 %v148
    %176 = vmatprep.subr.mxu0 0.0
    %177 = vmatpush1.msra.mxu0 %v147
    %178 = vmatprep.subr.mxu0 0.0
    %179 = vmatpush1.msra.mxu0 %v146
    %180 = vmatprep.subr.mxu0 0.0
    %181 = vmatpush1.msra.mxu0 %v145
    %182 = vmatprep.subr.mxu0 0.0
    %183 = vmatpush1.msra.mxu0 %v144
    %184 = vmatprep.subr.mxu0 0.0
    %185 = vmatpush1.msra.mxu0 %v143
    %186 = vmatprep.subr.mxu0 0.0
    %187 = vmatpush1.msra.mxu0 %v142
    %188 = vmatprep.subr.mxu0 0.0
    %189 = vmatpush1.msra.mxu0 %v141
    %190 = vmatprep.subr.mxu0 0.0
    %191 = vmatpush1.msra.mxu0 %v140
    %192 = vmatprep.subr.mxu0 0.0
    %193 = vmatpush1.msra.mxu0 %v139
    %194 = vmatprep.subr.mxu0 0.0
    %195 = vmatpush2.msra.mxu0 0.0
    %196 = vmatprep.subr.mxu0 0.0
    %197 = vmatpush2.msra.mxu0 0.0
    %198 = vmatprep.subr.mxu0 0.0
    %199 = vmatpush2.msra.mxu0 0.0
    %200 = vmatprep.subr.mxu0 0.0
    %201 = vmatpush2.msra.mxu0 0.0
    %202 = vmatprep.subr.mxu0 0.0
    %203 = vmatpush2.msra.mxu0 0.0
    %204 = vmatprep.subr.mxu0 0.0
    %205 = vmatpush2.msra.mxu0 0.0
    %206 = vmatprep.subr.mxu0 0.0
    %207 = vmatpush2.msra.mxu0 0.0
    %208 = vmatprep.subr.mxu0 0.0
    %209 = vmatpush2.msra.mxu0 0.0
    %210 = vmatprep.subr.mxu0 0.0
    %211 = vmatpush2.msra.mxu0 0.0
    %212 = vmatprep.subr.mxu0 0.0
    %213 = vmatpush2.msra.mxu0 0.0
    %214 = vmatprep.subr.mxu0 0.0
    %215 = vmatpush2.msra.mxu0 0.0
    %216 = vmatprep.subr.mxu0 0.0
    %217 = vmatpush2.msra.mxu0 0.0
    %218 = vmatprep.subr.mxu0 0.0
    %219 = vmatpush2.msra.mxu0 0.0
    %220 = vmatprep.subr.mxu0 0.0
    %221 = vmatpush2.msra.mxu0 0.0
    %222 = vmatprep.subr.mxu0 0.0
    %223 = vmatpush2.msra.mxu0 0.0
    %224 = vmatprep.subr.mxu0 0.0
    %225 = vmatpush2.msra.mxu0 0.0
    %226 = vmatprep.mubr.f32.mxu0 0.0
    %227 = vmatmul.mubr.f32.gmra.mxu0 %v138
    %v228 = vpop.f32.mrf.mxu0
    %v229 = vadd.f32 %v160, %v228
    %v230 = vpop.f32.mrf.mxu0
    %231 = vdwg.mxu0
    %v232 = vmax.f32 %v229, 0.0
    %v233 = vmin.f32 %v232, 6.0
    %v234 = vld [vmem:[%s5] sm:$0xff]
    %v235 = vld [vmem:[%s5 + $0x8] sm:$0xff]
    %v236 = vld [vmem:[%s5 + $0x10] sm:$0xff]
    %v237 = vld [vmem:[%s5 + $0x18] sm:$0xff]
    %v238 = vld [vmem:[%s5 + $0x20] sm:$0xff]
    %v239 = vld [vmem:[%s5 + $0x28] sm:$0xff]
    %v240 = vld [vmem:[%s5 + $0x30] sm:$0xff]
    %v241 = vld [vmem:[%s5 + $0x38] sm:$0xff]
    %v242 = vld [vmem:[%s5 + $0x40] sm:$0xff]
    %v243 = vld [vmem:[%s5 + $0x48] sm:$0xff]
    %v244 = vld [vmem:[%s5 + $0x50] sm:$0xff]
    %v245 = vld [vmem:[%s5 + $0x58] sm:$0xff]
    %v246 = vld [vmem:[%s5 + $0x60] sm:$0xff]
    %v247 = vld [vmem:[%s5 + $0x68] sm:$0xff]
    %v248 = vld [vmem:[%s5 + $0x70] sm:$0xff]
    %v249 = vld [vmem:[%s5 + $0x78] sm:$0xff]
    %v250 = vld [vmem:[%s6] sm:$0x1]
    %v252 = vlaneseq
    %v253 = vshrl.u32 %v252, 7
    %v254 = vsub.s32 0, %v253
    %v255 = vrot.slane %v250, %v254
    %257 = vmatprep.subr.mxu0 0.0
    %258 = vmatpush1.msra.mxu0 %v249
    %259 = vmatprep.subr.mxu0 0.0
    %260 = vmatpush1.msra.mxu0 %v248
    %261 = vmatprep.subr.mxu0 0.0
    %262 = vmatpush1.msra.mxu0 %v247
    %263 = vmatprep.subr.mxu0 0.0
    %264 = vmatpush1.msra.mxu0 %v246
    %265 = vmatprep.subr.mxu0 0.0
    %266 = vmatpush1.msra.mxu0 %v245
    %267 = vmatprep.subr.mxu0 0.0
    %268 = vmatpush1.msra.mxu0 %v244
    %269 = vmatprep.subr.mxu0 0.0
    %270 = vmatpush1.msra.mxu0 %v243
    %271 = vmatprep.subr.mxu0 0.0
    %272 = vmatpush1.msra.mxu0 %v242
    %273 = vmatprep.subr.mxu0 0.0
    %274 = vmatpush1.msra.mxu0 %v241
    %275 = vmatprep.subr.mxu0 0.0
    %276 = vmatpush1.msra.mxu0 %v240
    %277 = vmatprep.subr.mxu0 0.0
    %278 = vmatpush1.msra.mxu0 %v239
    %279 = vmatprep.subr.mxu0 0.0
    %280 = vmatpush1.msra.mxu0 %v238
    %281 = vmatprep.subr.mxu0 0.0
    %282 = vmatpush1.msra.mxu0 %v237
    %283 = vmatprep.subr.mxu0 0.0
    %284 = vmatpush1.msra.mxu0 %v236
    %285 = vmatprep.subr.mxu0 0.0
    %286 = vmatpush1.msra.mxu0 %v235
    %287 = vmatprep.subr.mxu0 0.0
    %288 = vmatpush1.msra.mxu0 %v234
    %289 = vmatprep.subr.mxu0 0.0
    %290 = vmatpush2.msra.mxu0 0.0
    %291 = vmatprep.subr.mxu0 0.0
    %292 = vmatpush2.msra.mxu0 0.0
    %293 = vmatprep.subr.mxu0 0.0
    %294 = vmatpush2.msra.mxu0 0.0
    %295 = vmatprep.subr.mxu0 0.0
    %296 = vmatpush2.msra.mxu0 0.0
    %297 = vmatprep.subr.mxu0 0.0
    %298 = vmatpush2.msra.mxu0 0.0
    %299 = vmatprep.subr.mxu0 0.0
    %300 = vmatpush2.msra.mxu0 0.0
    %301 = vmatprep.subr.mxu0 0.0
    %302 = vmatpush2.msra.mxu0 0.0
    %303 = vmatprep.subr.mxu0 0.0
    %304 = vmatpush2.msra.mxu0 0.0
    %305 = vmatprep.subr.mxu0 0.0
    %306 = vmatpush2.msra.mxu0 0.0
    %307 = vmatprep.subr.mxu0 0.0
    %308 = vmatpush2.msra.mxu0 0.0
    %309 = vmatprep.subr.mxu0 0.0
    %310 = vmatpush2.msra.mxu0 0.0
    %311 = vmatprep.subr.mxu0 0.0
    %312 = vmatpush2.msra.mxu0 0.0
    %313 = vmatprep.subr.mxu0 0.0
    %314 = vmatpush2.msra.mxu0 0.0
    %315 = vmatprep.subr.mxu0 0.0
    %316 = vmatpush2.msra.mxu0 0.0
    %317 = vmatprep.subr.mxu0 0.0
    %318 = vmatpush2.msra.mxu0 0.0
    %319 = vmatprep.subr.mxu0 0.0
    %320 = vmatpush2.msra.mxu0 0.0
    %321 = vmatprep.mubr.f32.mxu0 0.0
    %322 = vmatmul.mubr.f32.gmra.mxu0 %v233
    %v323 = vpop.f32.mrf.mxu0
    %v324 = vadd.f32 %v255, %v323
    %v325 = vpop.f32.mrf.mxu0
    %326 = vdwg.mxu0
    %v327 = vsub.f32 0.0, %v324
    %v328 = vmul.f32 %v327, 1.442695
    %v329 = vpow.pop %v328
    %v330 = vadd.f32 %v329, 1.0
    %v331 = vrcp.pop %v330
    %vm332 = vcmask 64512
    %333 = vst.msk [vmem:[#allocation7] sm:$0xff] %vm332, %v331
    // Predicated region
    $region38: #{tpu_custom_call.1} parent=1 // pred_check
      _
    $region39: #{tpu_custom_call.1} parent=1 // pred_check_branch
      %335 = sbr.rel (0) target = $region41
    $region40: #{tpu_custom_call.1} parent=1 // pred_region
      %s337 = ssub.s32 128, 128
      %338 = vsyncadd [#allocation4], %s337
      %s340 = sshll.u32 [#allocation7], 4
      %s341 = int_to_ptr.vmem [resolvable:$true] %s340
      %343 = dma.vmem_to_hbm [thread:$0]  %s341, 128, %s7, [#allocation4]
    $region41: #{tpu_custom_call.1} parent=1 // pred_fallthru
      _
    // Predicated region
    $region42: #{tpu_custom_call.1} parent=1 // pred_check
      _
    $region43: #{tpu_custom_call.1} parent=1 // pred_check_branch
      %345 = sbr.rel (0) target = $region45
    $region44: #{tpu_custom_call.1} parent=1 // pred_region
      %346 = dma.done [#allocation4], 128
    $region45: #{tpu_custom_call.1} parent=1 // pred_fallthru
      _
    %347 = vsyncpa [#allocation3], 1
    %348 = vsyncpa [#allocation6], 1
    %349 = vsyncpa [#allocation4], 1

</llo_original>
